<compile_context>
chip_gen: v6e
topology: v6e:2x2x1
jax: 0.10.0
libtpu: 0.0.40
codegen_flags: <defaults>
</compile_context>

<pallas_src>
import functools

import jax
import jax.numpy as jnp
from jax import lax
from jax.experimental import pallas as pl
from jax.experimental.pallas import tpu as pltpu

_LANE = 128
_TARGET_OUT_BLOCK_BYTES = 2 << 20     # ~2 MiB output block per grid step
_MAX_TOKENS_PER_CALL = 128 * 1024     # bounds the scalar-prefetched ids' SMEM footprint


def _round_up(x, m):
    return ((x + m - 1) // m) * m


def _sublane_tile(dtype):
    itemsize = jnp.dtype(dtype).itemsize
    return max(8, 32 // max(itemsize, 1))   # 8 for f32, 16 for bf16, 32 for int8/fp8


def _vmem_budget_bytes():
    cap = 64 << 20   # conservative default (v7x has 64 MiB per TensorCore)
    try:
        info = pltpu.get_tpu_info()
        cap = int(getattr(info, "vmem_capacity_bytes", cap) or cap)
    except Exception:
        pass
    # Leave headroom for compiler scratch: ~112 MiB on v5e/v6e, ~48 MiB on v7x.
    return max(cap - (16 << 20), 32 << 20)


def _gather_kernel(ids_ref, table_ref, out_ref, *, tb, sub):
    # ids_ref:   (N_chunk,) int32 in SMEM (scalar prefetch, already clipped)
    # table_ref: (V, Dp)    table block resident in VMEM (fetched once)
    # out_ref:   (tb, Dp)   gathered rows for this token block
    base = pl.multiple_of(pl.program_id(0) * tb, tb)
    n_groups = tb // sub

    def group_body(g, carry):
        off = pl.multiple_of(g * sub, sub)
        # Assemble `sub` rows and write them with one full-sublane (unmasked) store.
        rows = [table_ref[pl.ds(ids_ref[base + off + r], 1), :] for r in range(sub)]
        out_ref[pl.ds(off, sub), :] = jnp.concatenate(rows, axis=0)
        return carry

    unroll = True if n_groups <= 8 else 4
    lax.fori_loop(0, n_groups, group_body, 0, unroll=unroll)


@functools.partial(jax.jit, static_argnames=("token_block", "sub"))
def _embedding_lookup(ids, table, token_block, sub):
    (n,) = ids.shape
    v, d = table.shape  # d is already padded to a multiple of 128 by the caller
    itemsize = jnp.dtype(table.dtype).itemsize

    # Table is fetched once (constant index map) but the pipeline still allocates two
    # buffers for it; output block is double-buffered; ids live in SMEM.
    # TODO(synk): use pipeline_mode=pl.Buffered(1) on the table block (halves its VMEM
    # footprint) once single-buffered pallas_call operands are universally supported.
    need = 2 * v * d * itemsize + 2 * token_block * d * itemsize + (2 << 20)
    vmem_limit = int(min(max(need, 32 << 20), _vmem_budget_bytes()))

    kernel = functools.partial(_gather_kernel, tb=token_block, sub=sub)
    grid = (n // token_block,)

    return pl.pallas_call(
        kernel,
        out_shape=jax.ShapeDtypeStruct((n, d), table.dtype),
        grid_spec=pltpu.PrefetchScalarGridSpec(
            num_scalar_prefetch=1,                 # ids -> SMEM
            grid=grid,
            in_specs=[
                # Full table as one block with a constant index map: DMA'd to VMEM
                # once, revisited (not re-fetched) on every grid step.
                pl.BlockSpec((v, d), lambda i, ids: (0, 0)),
            ],
            out_specs=pl.BlockSpec((token_block, d), lambda i, ids: (i, 0)),
        ),
        compiler_params=pltpu.CompilerParams(
            dimension_semantics=("parallel",),     # token blocks are independent
            vmem_limit_bytes=vmem_limit,
        ),
    )(ids, table)


def custom_embedding(x, table):
    """Mirrors CustomEmbedding.forward:
       - if x is not a 'long' (integer index) tensor, return x unchanged;
       - otherwise return embedding lookup with shape x.shape + (D,)."""
    if x.dtype != jnp.int32 and x.dtype != jnp.int64:
        return x

    v, d = table.shape
    orig_shape = x.shape
    ids = x.reshape(-1).astype(jnp.int32)
    # torch.nn.Embedding would raise on out-of-range ids; we clamp once here instead.
    ids = jnp.clip(ids, 0, v - 1)
    n = ids.shape[0]

    # Lane-dense output: pad the embedding dim to a multiple of 128 once, slice after.
    d_pad = _round_up(d, _LANE)
    if d_pad != d:
        table = jnp.pad(table, ((0, 0), (0, d_pad - d)))

    sub = _sublane_tile(table.dtype)
    itemsize = jnp.dtype(table.dtype).itemsize

    # Token block sized so the output block is ~2 MiB, clamped to [256, 4096]; shrink
    # for tiny inputs but keep >= 2 grid steps; round to the dtype sublane tile.
    tb = _TARGET_OUT_BLOCK_BYTES // (d_pad * itemsize)
    tb = int(min(max(tb, 256), 4096))
    tb = min(tb, _round_up(max(pl.cdiv(n, 2), 1), sub))
    tb = _round_up(max(tb, sub), sub)

    # If the VMEM-resident plan can't fit, fall back to a plain XLA gather.
    # TODO(synk): implement an HBM DMA row-gather path (table in pl.ANY + a ring of
    # in-flight pltpu.make_async_copy per row/chunk) for tables too large for VMEM.
    need = 2 * v * d_pad * itemsize + 2 * tb * d_pad * itemsize + (2 << 20)
    if need > _vmem_budget_bytes():
        out = jnp.take(table, ids, axis=0)[:, :d]
        return out.reshape(*orig_shape, d)

    pad = (-n) % tb
    if pad:
        ids = jnp.pad(ids, (0, pad))  # padded ids are 0 -> valid row, sliced off below
    n_padded = ids.shape[0]

    # Chunk very long sequences so the scalar-prefetched ids stay small in SMEM.
    chunk = max(tb, (_MAX_TOKENS_PER_CALL // tb) * tb)
    outs = []
    for start in range(0, n_padded, chunk):
        ids_chunk = ids[start:start + chunk]
        outs.append(_embedding_lookup(ids_chunk, table, token_block=tb, sub=sub))
    out = outs[0] if len(outs) == 1 else jnp.concatenate(outs, axis=0)

    out = out[:n, :d]
    return out.reshape(*orig_shape, d)


if __name__ == "__main__":
    key = jax.random.PRNGKey(0)
    k_tab, k_idx = jax.random.split(key)

    vocab_size = 64
    embed_dim = 128
    batch, seq = 2, 8

    # Deterministic parameter init (nn.Embedding weight: (num_embeddings, embedding_dim), f32).
    table = jax.random.normal(k_tab, (vocab_size, embed_dim), dtype=jnp.float32)

    # Integer ("long") input -> embedding lookup path.
    x_int = jax.random.randint(k_idx, (batch, seq), 0, vocab_size, dtype=jnp.int32)
    out = custom_embedding(x_int, table)
    out = jax.block_until_ready(out)
    assert out.shape == (batch, seq, embed_dim), out.shape

    # Reference check against plain JAX gather.
    ref = table[x_int]
    assert jnp.allclose(out, ref, atol=1e-6), "mismatch vs reference gather"

    # Non-integer input -> pass-through path (matches `if x.dtype != torch.long: return x`).
    x_f = jax.random.normal(key, (batch, seq), dtype=jnp.float32)
    passthrough = custom_embedding(x_f, table)
    assert passthrough is x_f

    print("KERNEL_OK")
</pallas_src>

<mosaic_0001>
module attributes {stable_mosaic.version = 11 : i64} {
  func.func @_gather_kernel(%arg0: i32, %arg1: memref<16xi32, #tpu.memory_space<smem>>, %arg2: memref<64x128xf32, #tpu.memory_space<vmem>>, %arg3: memref<8x128xf32, #tpu.memory_space<vmem>>) attributes {dimension_semantics = [#tpu.dimension_semantics<parallel>], iteration_bounds = array<i64: 2>, scalar_prefetch = 1 : i64, scratch_operands = 0 : i64, tpu.core_type = #tpu.core_type<tc>, window_params = [{pipeline_mode = #tpu.pipeline_mode<synchronous>, transform_indices = @transform_0, window_bounds = array<i64: 64, 128>}, {transform_indices = @transform_1, window_bounds = array<i64: 8, 128>}]} {
    %c8_i32 = arith.constant 8 : i32
    %0 = arith.muli %arg0, %c8_i32 : i32
    %1 = tpu.assume_multiple %0, 8 : i32
    %c0_i32 = arith.constant 0 : i32
    %c8_i32_0 = arith.constant 8 : i32
    %2 = arith.muli %c0_i32, %c8_i32_0 : i32
    %3 = tpu.assume_multiple %2, 8 : i32
    %4 = arith.addi %1, %3 : i32
    %c0_i32_1 = arith.constant 0 : i32
    %5 = arith.addi %4, %c0_i32_1 : i32
    %6 = arith.index_cast %5 : i32 to index
    %7 = memref.load %arg1[%6] : memref<16xi32, #tpu.memory_space<smem>>
    %8 = arith.index_cast %7 : i32 to index
    %c0 = arith.constant 0 : index
    %9 = vector.load %arg2[%8, %c0] : memref<64x128xf32, #tpu.memory_space<vmem>>, vector<1x128xf32>
    %10 = arith.addi %1, %3 : i32
    %c1_i32 = arith.constant 1 : i32
    %11 = arith.addi %10, %c1_i32 : i32
    %12 = arith.index_cast %11 : i32 to index
    %13 = memref.load %arg1[%12] : memref<16xi32, #tpu.memory_space<smem>>
    %14 = arith.index_cast %13 : i32 to index
    %c0_2 = arith.constant 0 : index
    %15 = vector.load %arg2[%14, %c0_2] : memref<64x128xf32, #tpu.memory_space<vmem>>, vector<1x128xf32>
    %16 = arith.addi %1, %3 : i32
    %c2_i32 = arith.constant 2 : i32
    %17 = arith.addi %16, %c2_i32 : i32
    %18 = arith.index_cast %17 : i32 to index
    %19 = memref.load %arg1[%18] : memref<16xi32, #tpu.memory_space<smem>>
    %20 = arith.index_cast %19 : i32 to index
    %c0_3 = arith.constant 0 : index
    %21 = vector.load %arg2[%20, %c0_3] : memref<64x128xf32, #tpu.memory_space<vmem>>, vector<1x128xf32>
    %22 = arith.addi %1, %3 : i32
    %c3_i32 = arith.constant 3 : i32
    %23 = arith.addi %22, %c3_i32 : i32
    %24 = arith.index_cast %23 : i32 to index
    %25 = memref.load %arg1[%24] : memref<16xi32, #tpu.memory_space<smem>>
    %26 = arith.index_cast %25 : i32 to index
    %c0_4 = arith.constant 0 : index
    %27 = vector.load %arg2[%26, %c0_4] : memref<64x128xf32, #tpu.memory_space<vmem>>, vector<1x128xf32>
    %28 = arith.addi %1, %3 : i32
    %c4_i32 = arith.constant 4 : i32
    %29 = arith.addi %28, %c4_i32 : i32
    %30 = arith.index_cast %29 : i32 to index
    %31 = memref.load %arg1[%30] : memref<16xi32, #tpu.memory_space<smem>>
    %32 = arith.index_cast %31 : i32 to index
    %c0_5 = arith.constant 0 : index
    %33 = vector.load %arg2[%32, %c0_5] : memref<64x128xf32, #tpu.memory_space<vmem>>, vector<1x128xf32>
    %34 = arith.addi %1, %3 : i32
    %c5_i32 = arith.constant 5 : i32
    %35 = arith.addi %34, %c5_i32 : i32
    %36 = arith.index_cast %35 : i32 to index
    %37 = memref.load %arg1[%36] : memref<16xi32, #tpu.memory_space<smem>>
    %38 = arith.index_cast %37 : i32 to index
    %c0_6 = arith.constant 0 : index
    %39 = vector.load %arg2[%38, %c0_6] : memref<64x128xf32, #tpu.memory_space<vmem>>, vector<1x128xf32>
    %40 = arith.addi %1, %3 : i32
    %c6_i32 = arith.constant 6 : i32
    %41 = arith.addi %40, %c6_i32 : i32
    %42 = arith.index_cast %41 : i32 to index
    %43 = memref.load %arg1[%42] : memref<16xi32, #tpu.memory_space<smem>>
    %44 = arith.index_cast %43 : i32 to index
    %c0_7 = arith.constant 0 : index
    %45 = vector.load %arg2[%44, %c0_7] : memref<64x128xf32, #tpu.memory_space<vmem>>, vector<1x128xf32>
    %46 = arith.addi %1, %3 : i32
    %c7_i32 = arith.constant 7 : i32
    %47 = arith.addi %46, %c7_i32 : i32
    %48 = arith.index_cast %47 : i32 to index
    %49 = memref.load %arg1[%48] : memref<16xi32, #tpu.memory_space<smem>>
    %50 = arith.index_cast %49 : i32 to index
    %c0_8 = arith.constant 0 : index
    %51 = vector.load %arg2[%50, %c0_8] : memref<64x128xf32, #tpu.memory_space<vmem>>, vector<1x128xf32>
    %52 = tpu.concatenate %9, %15, %21, %27, %33, %39, %45, %51 in 0 : vector<1x128xf32>, vector<1x128xf32>, vector<1x128xf32>, vector<1x128xf32>, vector<1x128xf32>, vector<1x128xf32>, vector<1x128xf32>, vector<1x128xf32> -> vector<8x128xf32>
    %53 = arith.index_cast %3 : i32 to index
    %c0_9 = arith.constant 0 : index
    %54 = vector.load %arg3[%53, %c0_9] : memref<8x128xf32, #tpu.memory_space<vmem>>, vector<8x128xf32>
    tpu.vector_store %arg3[%53, %c0_9], %52 {strides = array<i32>} : memref<8x128xf32, #tpu.memory_space<vmem>>, vector<8x128xf32>,
    %c1_i32_10 = arith.constant 1 : i32
    return
  }
  func.func @transform_0(%arg0: i32, %arg1: memref<16xi32, #tpu.memory_space<smem>>) -> (i32, i32) {
    %c0_i32 = arith.constant 0 : i32
    %c0_i32_0 = arith.constant 0 : i32
    %c0_i32_1 = arith.constant 0 : i32
    return %c0_i32, %c0_i32_0 : i32, i32
  }
  func.func @transform_1(%arg0: i32, %arg1: memref<16xi32, #tpu.memory_space<smem>>) -> (i32, i32) {
    %c0_i32 = arith.constant 0 : i32
    %c0_i32_0 = arith.constant 0 : i32
    return %arg0, %c0_i32 : i32, i32
  }
}

</mosaic_0001>

<llo_original>
// kernel: _embedding_lookup.1
$region0: #{_embedding_lookup.1}
  #allocation0 [shape = 'u32[]', space=smem, size = 0x4, offset = 0x4, fixed_abs, tag = 'smem constant byte address 0x4 - core index']
  #allocation1 [shape = 'u32[144,128]{1,0:T(1,128)}', space=vmem, size = 0x12000, scoped, tag = 'internal scratch']
  #allocation2 [shape = 's32[1]{0}', space=sflag, size = 0x4, scoped, tag = 'scoped memory for _embedding_lookup.1']
  #allocation3 [shape = 'u8[512]{0}', space=smem, size = 0x200, scoped, tag = 'prefetched SMEM operand 0']
  %s0 = inlined_call_operand.hbm [shape: s32[16], index: 0, kind: input, shape index: {}]
  %s1 = inlined_call_operand.hbm [shape: f32[64,128], index: 1, kind: input, shape index: {}]
  %s2 = inlined_call_operand.hbm [shape: f32[16,128], index: 2, kind: output, shape index: {}]
  %s3 = sld [smem:[#allocation0]]
  $region41: #{_embedding_lookup.1} parent=0
    _
  %s5 = ssub.s32 1, %s3
  %s6 = scalar_select 0, %s5, %s3
  %8 = dma.hbm_to_smem %s0, 16, [#allocation3], [#allocation2]
  %9 = dma.done [#allocation2], 16
  %10 = sfence
  $region1: #{_embedding_lookup.1} parent=0
    #allocation4 [shape = 'u8[32768]{0}', space=vmem, size = 0x8000, scoped, tag = 'input window, operand 1, single buffered']
    #allocation5 [shape = 's32[2]{0}', space=sflag, size = 0x8, scoped, tag = 'scoped memory for _embedding_lookup.1']
    #allocation6 [shape = 's32[2]{0}', space=sflag, size = 0x8, scoped, tag = 'scoped memory for _embedding_lookup.1']
    #allocation7 [shape = 'u8[8192]{0}', space=vmem, size = 0x2000, scoped, tag = 'output window, operand 0']
    %11 = vsyncpa [#allocation5], 0
    %12 = vsyncpa [#allocation6], 0
    %s13 = scalar_lea.sflag [#allocation6], 1
    %14 = vsyncpa %s13, 0
    loop: start=0, step=1, limit=4
    $region2: #{_embedding_lookup.1} parent=1 // loop_pre_header
      _
    $region3: #{_embedding_lookup.1} parent=1 // loop_header
      %s16 = sphi 0, %s20
      %p17 = scmp.ge.s32.totalorder %s16, 4
      %s24 = sphi 0, %s24
      %s26 = sphi 0, %s24
      %s27 = sphi 0, %s26
      %s41 = sphi 0, %s27
      %s47 = sphi 0, %s49
      %s50 = sphi 0, %s47
      %s51 = sphi 0, %s50
      %s67 = sphi 0, %s51
    $region4: #{_embedding_lookup.1} parent=1 // loop_header_branch
      %19 = sbr.rel (%p17) target = $region8
    $region5: #{_embedding_lookup.1} parent=1 // loop_body
      %s21 = ssub.s32 %s16, 1
      %s22 = ssub.s32 %s16, 2
      %s23 = sadd.s32 %s16, 1
      %s25 = sadd.s32 %s24, 1
      %p28 = scmp.eq.s32.totalorder %s16, 1
      %p29 = scmp.ne.s32.totalorder %s24, %s26
      %p30 = scmp.eq.s32.totalorder %s16, 0
      %p31 = por %p29, %p30
      %p32 = scmp.ne.s32.totalorder %s24, %s26
      %p33 = scmp.eq.s32.totalorder %s21, 1
      %p34 = por %p32, %p33
      %p35 = scmp.ne.s32.totalorder %s26, %s27
      %p36 = scmp.eq.s32.totalorder %s21, 0
      %p37 = por %p35, %p36
      %p38 = scmp.ne.s32.totalorder %s26, %s27
      %p39 = scmp.eq.s32.totalorder %s22, 1
      %p40 = por %p38, %p39
      %p42 = scmp.ne.s32.totalorder %s27, %s41
      %p43 = scmp.eq.s32.totalorder %s22, 0
      %p44 = por %p42, %p43
      %s45 = ssub.s32 %s16, %s23
      %p46 = scmp.eq.s32.totalorder %s45, 0
      %s48 = sadd.s32 %s47, 1
      %s49 = scalar_select %p46, %s47, %s48
      %p52 = pneg %p46
      %p53 = scmp.eq.s32.totalorder %s16, 1
      %p54 = por %p52, %p53
      %p55 = scmp.ne.s32.totalorder %s47, %s50
      %p56 = scmp.eq.s32.totalorder %s16, 0
      %p57 = por %p55, %p56
      %p58 = scmp.ne.s32.totalorder %s47, %s50
      %p59 = scmp.eq.s32.totalorder %s21, 1
      %p60 = por %p58, %p59
      %p61 = scmp.ne.s32.totalorder %s50, %s51
      %p62 = scmp.eq.s32.totalorder %s21, 0
      %p63 = por %p61, %p62
      %p64 = scmp.ne.s32.totalorder %s50, %s51
      %p65 = scmp.eq.s32.totalorder %s22, 1
      %p66 = por %p64, %p65
      %p68 = scmp.ne.s32.totalorder %s51, %s67
      %p69 = scmp.eq.s32.totalorder %s22, 0
      %p70 = por %p68, %p69
      %p71 = scmp.le.s32.totalorder 1, %s16
      %p72 = scmp.lt.s32.totalorder %s16, 3
      %p73 = pnand %p71, %p72
      %p74 = pneg %p73
      // Predicated region
      $region9: #{_embedding_lookup.1} parent=5 // pred_check
        _
      $region10: #{_embedding_lookup.1} parent=5 // pred_check_branch
        %76 = sbr.rel (%p73) target = $region12
      $region11: #{_embedding_lookup.1} parent=5 // pred_region
        %s77 = ssub.s32 %s16, 1
        // Predicated region
        $region13: #{_embedding_lookup.1} parent=11 // pred_check
          %p78 = pneg %p37
        $region14: #{_embedding_lookup.1} parent=11 // pred_check_branch
          %80 = sbr.rel (%p78) target = $region16
        $region15: #{_embedding_lookup.1} parent=11 // pred_region
          %s82 = ssub.s32 1024, 1024
          %83 = vsyncadd [#allocation5], %s82
          %s84 = sshll.u32 [#allocation4], 4
          %s85 = int_to_ptr.vmem [resolvable:$true] %s84
          %90 = dma.hbm_to_vmem [thread:$0]  %s1, 1024, %s85, [#allocation5], 128, 128, 8
        $region16: #{_embedding_lookup.1} parent=11 // pred_fallthru
          _
      $region12: #{_embedding_lookup.1} parent=5 // pred_fallthru
        _
      %p91 = scmp.lt.s32.totalorder %s16, 2
      // Predicated region
      $region17: #{_embedding_lookup.1} parent=5 // pred_check
        %p92 = pneg %p91
      $region18: #{_embedding_lookup.1} parent=5 // pred_check_branch
        %94 = sbr.rel (%p92) target = $region20
      $region19: #{_embedding_lookup.1} parent=5 // pred_region
        _
      $region20: #{_embedding_lookup.1} parent=5 // pred_fallthru
        _
      %p95 = scmp.le.s32.totalorder 1, %s16
      %p96 = scmp.lt.s32.totalorder %s16, 3
      %p97 = pnand %p95, %p96
      %p98 = pneg %p97
      // Predicated region
      $region21: #{_embedding_lookup.1} parent=5 // pred_check
        _
      $region22: #{_embedding_lookup.1} parent=5 // pred_check_branch
        %100 = sbr.rel (%p97) target = $region24
      $region23: #{_embedding_lookup.1} parent=5 // pred_region
        %s101 = ssub.s32 %s16, 1
        // Predicated region
        $region25: #{_embedding_lookup.1} parent=23 // pred_check
          %p102 = pneg %p37
        $region26: #{_embedding_lookup.1} parent=23 // pred_check_branch
          %104 = sbr.rel (%p102) target = $region28
        $region27: #{_embedding_lookup.1} parent=23 // pred_region
          %105 = dma.done [#allocation5], 1024
        $region28: #{_embedding_lookup.1} parent=23 // pred_fallthru
          _
        %p106 = pneg %p37
        %p107 = pneg %p34
        %p108 = pneg %p63
        %p109 = pneg %p60
        %s110 = sand.u32 %s50, 1
        %s111 = scalar_lea.sflag [#allocation6], %s110
        %s112 = sand.u32 %s50, 1
        %s113 = smul.addr %s112, 8
        %s114 = scalar_lea.vmem [#allocation7], %s113
        %s115 = smul.u32 %s21, 8
        %s116 = sadd.s32 %s115, 0
        %s117 = sld [smem:[#allocation3 + %s116]]
        %s118 = scalar_lea.vmem [#allocation4], %s117
        %v119 = vld [vmem:[%s118] sm:$0x1]
        %s120 = sadd.s32 %s116, 1
        %s121 = sld [smem:[#allocation3 + %s120]]
        %s122 = scalar_lea.vmem [#allocation4], %s121
        %v123 = vld [vmem:[%s122] sm:$0x1]
        %s124 = sadd.s32 %s116, 2
        %s125 = sld [smem:[#allocation3 + %s124]]
        %s126 = scalar_lea.vmem [#allocation4], %s125
        %v127 = vld [vmem:[%s126] sm:$0x1]
        %s128 = sadd.s32 %s116, 3
        %s129 = sld [smem:[#allocation3 + %s128]]
        %s130 = scalar_lea.vmem [#allocation4], %s129
        %v131 = vld [vmem:[%s130] sm:$0x1]
        %s132 = sadd.s32 %s116, 4
        %s133 = sld [smem:[#allocation3 + %s132]]
        %s134 = scalar_lea.vmem [#allocation4], %s133
        %v135 = vld [vmem:[%s134] sm:$0x1]
        %s136 = sadd.s32 %s116, 5
        %s137 = sld [smem:[#allocation3 + %s136]]
        %s138 = scalar_lea.vmem [#allocation4], %s137
        %v139 = vld [vmem:[%s138] sm:$0x1]
        %s140 = sadd.s32 %s116, 6
        %s141 = sld [smem:[#allocation3 + %s140]]
        %s142 = scalar_lea.vmem [#allocation4], %s141
        %v143 = vld [vmem:[%s142] sm:$0x1]
        %s144 = sadd.s32 %s116, 7
        %s145 = sld [smem:[#allocation3 + %s144]]
        %s146 = scalar_lea.vmem [#allocation4], %s145
        %v147 = vld [vmem:[%s146] sm:$0x1]
        %v149 = vrot.slane %v123, 7
        %v152 = vrot.slane %v127, 6
        %v155 = vrot.slane %v131, 5
        %v158 = vrot.slane %v135, 4
        %v161 = vrot.slane %v139, 3
        %v164 = vrot.slane %v143, 2
        %v167 = vrot.slane %v147, 1
        %vm169 = vcmask 1040384
        %v170 = vsel %vm169, %v119, %v149
        %vm171 = vcmask 1041408
        %v172 = vsel %vm171, %v170, %v152
        %vm173 = vcmask 1042432
        %v174 = vsel %vm173, %v172, %v155
        %vm175 = vcmask 1043456
        %v176 = vsel %vm175, %v174, %v158
        %vm177 = vcmask 1044480
        %v178 = vsel %vm177, %v176, %v161
        %vm179 = vcmask 1045504
        %v180 = vsel %vm179, %v178, %v164
        %vm181 = vcmask 1046528
        %v182 = vsel %vm181, %v180, %v167
        %183 = vst [vmem:[%s114] sm:$0xff] %v182
        %s184 = sand.u32 %s50, 1
        %s185 = scalar_lea.sflag [#allocation6], %s184
        %s186 = sand.u32 %s50, 1
        %s187 = smul.addr %s186, 8
        %s188 = scalar_lea.vmem [#allocation7], %s187
        // Predicated region
        $region29: #{_embedding_lookup.1} parent=23 // pred_check
          %p189 = pneg %p60
        $region30: #{_embedding_lookup.1} parent=23 // pred_check_branch
          %191 = sbr.rel (%p189) target = $region32
        $region31: #{_embedding_lookup.1} parent=23 // pred_region
          %s193 = ssub.s32 128, 128
          %194 = vsyncadd %s185, %s193
          %s195 = smul.addr %s21, 128
          %s196 = scalar_lea.hbm %s2, %s195
          %s198 = sshll.u32 %s188, 4
          %s199 = int_to_ptr.vmem [resolvable:$true] %s198
          %201 = dma.vmem_to_hbm [thread:$0]  %s199, 128, %s196, %s185
        $region32: #{_embedding_lookup.1} parent=23 // pred_fallthru
          _
      $region24: #{_embedding_lookup.1} parent=5 // pred_fallthru
        _
      %p202 = scmp.le.s32.totalorder 2, %s16
      // Predicated region
      $region33: #{_embedding_lookup.1} parent=5 // pred_check
        %p203 = pneg %p202
      $region34: #{_embedding_lookup.1} parent=5 // pred_check_branch
        %205 = sbr.rel (%p203) target = $region36
      $region35: #{_embedding_lookup.1} parent=5 // pred_region
        %s206 = ssub.s32 %s16, 2
        // Predicated region
        $region37: #{_embedding_lookup.1} parent=35 // pred_check
          %p207 = pneg %p66
        $region38: #{_embedding_lookup.1} parent=35 // pred_check_branch
          %209 = sbr.rel (%p207) target = $region40
        $region39: #{_embedding_lookup.1} parent=35 // pred_region
          %s210 = sand.u32 %s51, 1
          %s211 = scalar_lea.sflag [#allocation6], %s210
          %s212 = sand.u32 %s51, 1
          %s213 = smul.addr %s212, 8
          %s214 = scalar_lea.vmem [#allocation7], %s213
          %215 = dma.done %s211, 128
        $region40: #{_embedding_lookup.1} parent=35 // pred_fallthru
          _
      $region36: #{_embedding_lookup.1} parent=5 // pred_fallthru
        _
    $region6: #{_embedding_lookup.1} parent=1 // loop_footer
      %s20 = sadd.s32 1, %s16
    $region7: #{_embedding_lookup.1} parent=1 // loop_footer_branch
      %15 = sbr.rel target = $region3
    $region8: #{_embedding_lookup.1} parent=1 // loop_exit
      _
    %216 = vsyncpa [#allocation5], 1
    %s217 = scalar_lea.sflag [#allocation5], 1
    %218 = vsyncpa %s217, 1
    %219 = vsyncpa [#allocation6], 1
    %s220 = scalar_lea.sflag [#allocation6], 1
    %221 = vsyncpa %s220, 1

</llo_original>
